<compile_context>
chip_gen: v7x
topology: tpu7x:2x2x1
jax: 0.10.0
libtpu: 0.0.40
codegen_flags: <defaults>
</compile_context>

<pallas_src>
import functools
import math

import jax
import jax.numpy as jnp
import numpy as np
from jax.experimental import pallas as pl
from jax.experimental.pallas import tpu as pltpu


def _round_up(x, m):
    return (x + m - 1) // m * m


# ---------------------------------------------------------------------------
# Fast path: LUT resident in VMEM, in-VMEM dynamic row reads (small tables).
# ---------------------------------------------------------------------------
def _embed_resident_kernel(ids_ref, lut_ref, out_ref, *, tokens_per_block, scale):
    blk = pl.program_id(0)
    scale_v = jnp.asarray(scale, out_ref.dtype)
    unroll = 8  # tokens_per_block is always a multiple of 8

    @pl.loop(0, tokens_per_block // unroll)
    def _(c):
        t0 = pl.multiple_of(c * unroll, unroll)
        for u in range(unroll):
            tok = ids_ref[blk, t0 + u]          # SMEM scalar read
            out_ref[t0 + u] = lut_ref[tok] * scale_v


# ---------------------------------------------------------------------------
# Large-table path: HBM LUT, K-deep row-DMA gather straight into out_ref.
# ---------------------------------------------------------------------------
def _embed_gather_kernel(ids_ref, lut_hbm, out_ref, sems, *,
                         tokens_per_block, num_slots, scale):
    blk = pl.program_id(0)
    T, K = tokens_per_block, num_slots        # K is a power of two, 8 <= K <= T

    def start_copy(tok, t, slot):
        pltpu.make_async_copy(lut_hbm.at[tok], out_ref.at[t], sems.at[slot]).start()

    def wait_copy(t, slot):
        # The wait descriptor only needs the same transfer shape + semaphore
        # slot as the matching start (each slot holds exactly one outstanding
        # row copy); the source row index is irrelevant for the wait.
        pltpu.make_async_copy(lut_hbm.at[0], out_ref.at[t], sems.at[slot]).wait()

    # Prime the pipeline: K row gathers in flight (static unroll).
    for s in range(K):
        start_copy(ids_ref[blk, s], s, s)

    # Steady state: unconditional wait + refill, unrolled x8.
    main_iters = T - K                        # multiple of 8 (both T and K are)
    unroll = 8
    if main_iters > 0:
        @pl.loop(0, main_iters // unroll)
        def _(c):
            t0 = pl.multiple_of(c * unroll, unroll)
            for u in range(unroll):
                t = t0 + u
                slot = t & (K - 1)
                nxt = ids_ref[blk, t + K]     # hoisted above the wait (SMEM fwd)
                wait_copy(t, slot)
                start_copy(nxt, t + K, slot)

    # Drain the last K rows (static unroll, wait only).
    for s in range(K):
        t = main_iters + s
        wait_copy(t, t & (K - 1))

    # All rows landed directly in the output block: one dense scaled overwrite.
    out_ref[...] = out_ref[...] * jnp.asarray(scale, out_ref.dtype)


# ---------------------------------------------------------------------------
# pallas_call wrapper for one chunk of token blocks.
# ---------------------------------------------------------------------------
def _lookup_blocks(ids2d, lut_p, *, use_resident, T, K, scale):
    """ids2d: (n_blocks, T) int32; lut_p: (vocab, d_model_p) ->
    (n_blocks * T, d_model_p) = lut_p[ids] * scale."""
    n_blocks = ids2d.shape[0]
    vocab, d_model_p = lut_p.shape
    itemsize = jnp.dtype(lut_p.dtype).itemsize

    if use_resident:
        kernel = functools.partial(_embed_resident_kernel,
                                   tokens_per_block=T, scale=scale)
        in_specs = [pl.BlockSpec((vocab, d_model_p), lambda i, ids: (0, 0))]
        scratch_shapes = []
    else:
        kernel = functools.partial(_embed_gather_kernel,
                                   tokens_per_block=T, num_slots=K, scale=scale)
        in_specs = [pl.BlockSpec(memory_space=pl.ANY)]       # LUT stays in HBM
        scratch_shapes = [pltpu.SemaphoreType.DMA((K,))]      # K in-flight rows

    grid_spec = pltpu.PrefetchScalarGridSpec(
        num_scalar_prefetch=1,               # ids2d -> SMEM
        grid=(n_blocks,),
        in_specs=in_specs,
        out_specs=pl.BlockSpec((T, d_model_p), lambda i, ids: (i, 0)),
        scratch_shapes=scratch_shapes,
    )

    return pl.pallas_call(
        kernel,
        out_shape=jax.ShapeDtypeStruct((n_blocks * T, d_model_p), lut_p.dtype),
        grid_spec=grid_spec,
        compiler_params=pltpu.CompilerParams(
            dimension_semantics=("parallel",),   # token blocks independent (2 TCs on v7x)
            vmem_limit_bytes=32 * 1024 * 1024,
        ),
        cost_estimate=pl.CostEstimate(
            flops=n_blocks * T * d_model_p,
            transcendentals=0,
            bytes_accessed=ids2d.size * 4 + 2 * n_blocks * T * d_model_p * itemsize,
        ),
    )(ids2d, lut_p)


def embeddings_forward(x, lut_weight, *, tokens_per_block=256, gather_slots=32,
                       small_table_max_bytes=4 * 1024 * 1024,
                       max_tokens_per_call=32768):
    """x: integer ids of any shape; lut_weight: (vocab, d_model).
    Returns lut_weight[x] * sqrt(d_model) with shape x.shape + (d_model,)."""
    orig_shape = x.shape
    vocab, d_model = lut_weight.shape
    n_tokens = int(np.prod(orig_shape))
    itemsize = jnp.dtype(lut_weight.dtype).itemsize
    scale = math.sqrt(float(d_model))

    # Lane-dense feature dim (no-op when d_model is already a multiple of 128).
    d_model_p = _round_up(d_model, 128)
    lut_p = (lut_weight if d_model_p == d_model
             else jnp.pad(lut_weight, ((0, 0), (0, d_model_p - d_model))))

    # Tokens per grid step: multiple of 8, capped so the double-buffered output
    # block (2 * T * d_model_p * itemsize) stays within ~8 MiB of VMEM
    # (safe on v5e's 16 MiB scoped default and v7x's 64 MiB/TC).
    t_cap = max(8, (8 * 1024 * 1024 // (2 * d_model_p * itemsize)) // 8 * 8)
    T = min(tokens_per_block, _round_up(n_tokens, 8), t_cap)
    T = max(8, T // 8 * 8)

    # Row-gather DMA pipeline depth: power of two in [8, T].
    K = max(8, min(gather_slots, T))
    K = 1 << (K.bit_length() - 1)

    use_resident = vocab * d_model_p * itemsize <= small_table_max_bytes

    # Clamp ids for safety.
    # TODO(synk): PyTorch nn.Embedding raises on out-of-range ids; we clamp.
    ids_flat = jnp.clip(x.reshape(n_tokens).astype(jnp.int32), 0, vocab - 1)

    # Chunk very long sequences over multiple pallas_calls so the
    # scalar-prefetched (n_blocks, T) id table keeps a bounded SMEM footprint.
    chunk = max(T, max_tokens_per_call // T * T)
    outs = []
    for start in range(0, n_tokens, chunk):
        ids_c = ids_flat[start:start + chunk]
        n_c = ids_c.shape[0]
        n_pad = _round_up(n_c, T)
        if n_pad != n_c:
            ids_c = jnp.pad(ids_c, (0, n_pad - n_c))     # pad tokens use id 0
        ids2d = ids_c.reshape(n_pad // T, T)
        out_c = _lookup_blocks(ids2d, lut_p, use_resident=use_resident,
                               T=T, K=K, scale=scale)
        outs.append(out_c[:n_c])
    out_flat = outs[0] if len(outs) == 1 else jnp.concatenate(outs, axis=0)
    if d_model_p != d_model:
        out_flat = out_flat[:, :d_model]
    return out_flat.reshape(*orig_shape, d_model)


if __name__ == "__main__":
    # Small shapes consistent with the module's forward.
    batch, seq = 2, 8
    vocab, d_model = 64, 32

    key = jax.random.PRNGKey(0)
    k_lut, k_ids = jax.random.split(key)

    # nn.Embedding default init is N(0, 1).
    lut_weight = jax.random.normal(k_lut, (vocab, d_model), dtype=jnp.float32)
    x = jax.random.randint(k_ids, (batch, seq), 0, vocab, dtype=jnp.int32)

    ref = jnp.take(lut_weight, x, axis=0) * math.sqrt(float(d_model))

    # 1) Small-table fast path (LUT resident in VMEM).
    out = jax.block_until_ready(embeddings_forward(x, lut_weight))
    np.testing.assert_allclose(np.asarray(out), np.asarray(ref), rtol=1e-6, atol=1e-6)

    # 2) Large-table path (HBM LUT + per-row DMA gather), forced at small shapes.
    out_g = jax.block_until_ready(
        embeddings_forward(x, lut_weight, small_table_max_bytes=0))
    np.testing.assert_allclose(np.asarray(out_g), np.asarray(ref), rtol=1e-6, atol=1e-6)

    print("KERNEL_OK")
</pallas_src>

<mosaic_0001>
module attributes {stable_mosaic.version = 11 : i64} {
  func.func @_embed_resident_kernel(%arg0: i32, %arg1: memref<1x16xi32, #tpu.memory_space<smem>>, %arg2: memref<64x128xf32, #tpu.memory_space<vmem>>, %arg3: memref<16x128xf32, #tpu.memory_space<vmem>>) attributes {dimension_semantics = [#tpu.dimension_semantics<parallel>], iteration_bounds = array<i64: 1>, scalar_prefetch = 1 : i64, scratch_operands = 0 : i64, tpu.core_type = #tpu.core_type<tc>, window_params = [{pipeline_mode = #tpu.pipeline_mode<synchronous>, transform_indices = @transform_0, window_bounds = array<i64: 64, 128>}, {transform_indices = @transform_1, window_bounds = array<i64: 16, 128>}]} {
    %cst = arith.constant 5.65685415 : f32
    %c0_i32 = arith.constant 0 : i32
    %c2_i32 = arith.constant 2 : i32
    %0 = arith.addi %c0_i32, %c2_i32 : i32
    %c1_i32 = arith.constant 1 : i32
    scf.for %arg4 = %c0_i32 to %0 step %c1_i32  : i32 {
      %c1_i32_1 = arith.constant 1 : i32
      %1 = arith.muli %arg4, %c1_i32_1 : i32
      %c0_i32_2 = arith.constant 0 : i32
      %2 = arith.addi %c0_i32_2, %1 : i32
      %c8_i32 = arith.constant 8 : i32
      %3 = arith.muli %2, %c8_i32 : i32
      %4 = tpu.assume_multiple %3, 8 : i32
      %c0_i32_3 = arith.constant 0 : i32
      %5 = arith.addi %4, %c0_i32_3 : i32
      %6 = arith.index_cast %arg0 : i32 to index
      %7 = arith.index_cast %5 : i32 to index
      %8 = memref.load %arg1[%6, %7] : memref<1x16xi32, #tpu.memory_space<smem>>
      %9 = arith.index_cast %8 : i32 to index
      %c0 = arith.constant 0 : index
      %10 = vector.load %arg2[%9, %c0] : memref<64x128xf32, #tpu.memory_space<vmem>>, vector<1x128xf32>
      %11 = vector.shape_cast %10 : vector<1x128xf32> to vector<128xf32>
      %12 = vector.broadcast %cst : f32 to vector<128xf32>
      %13 = arith.mulf %11, %12 : vector<128xf32>
      %c0_i32_4 = arith.constant 0 : i32
      %14 = arith.addi %4, %c0_i32_4 : i32
      %15 = arith.index_cast %14 : i32 to index
      %c0_5 = arith.constant 0 : index
      %16 = vector.load %arg3[%15, %c0_5] : memref<16x128xf32, #tpu.memory_space<vmem>>, vector<1x128xf32>
      %17 = vector.shape_cast %16 : vector<1x128xf32> to vector<128xf32>
      %18 = vector.shape_cast %13 : vector<128xf32> to vector<1x128xf32>
      tpu.vector_store %arg3[%15, %c0_5], %18 {strides = array<i32>} : memref<16x128xf32, #tpu.memory_space<vmem>>, vector<1x128xf32>,
      %c1_i32_6 = arith.constant 1 : i32
      %19 = arith.addi %4, %c1_i32_6 : i32
      %20 = arith.index_cast %arg0 : i32 to index
      %21 = arith.index_cast %19 : i32 to index
      %22 = memref.load %arg1[%20, %21] : memref<1x16xi32, #tpu.memory_space<smem>>
      %23 = arith.index_cast %22 : i32 to index
      %c0_7 = arith.constant 0 : index
      %24 = vector.load %arg2[%23, %c0_7] : memref<64x128xf32, #tpu.memory_space<vmem>>, vector<1x128xf32>
      %25 = vector.shape_cast %24 : vector<1x128xf32> to vector<128xf32>
      %26 = vector.broadcast %cst : f32 to vector<128xf32>
      %27 = arith.mulf %25, %26 : vector<128xf32>
      %c1_i32_8 = arith.constant 1 : i32
      %28 = arith.addi %4, %c1_i32_8 : i32
      %29 = arith.index_cast %28 : i32 to index
      %c0_9 = arith.constant 0 : index
      %30 = vector.load %arg3[%29, %c0_9] : memref<16x128xf32, #tpu.memory_space<vmem>>, vector<1x128xf32>
      %31 = vector.shape_cast %30 : vector<1x128xf32> to vector<128xf32>
      %32 = vector.shape_cast %27 : vector<128xf32> to vector<1x128xf32>
      tpu.vector_store %arg3[%29, %c0_9], %32 {strides = array<i32>} : memref<16x128xf32, #tpu.memory_space<vmem>>, vector<1x128xf32>,
      %c2_i32_10 = arith.constant 2 : i32
      %33 = arith.addi %4, %c2_i32_10 : i32
      %34 = arith.index_cast %arg0 : i32 to index
      %35 = arith.index_cast %33 : i32 to index
      %36 = memref.load %arg1[%34, %35] : memref<1x16xi32, #tpu.memory_space<smem>>
      %37 = arith.index_cast %36 : i32 to index
      %c0_11 = arith.constant 0 : index
      %38 = vector.load %arg2[%37, %c0_11] : memref<64x128xf32, #tpu.memory_space<vmem>>, vector<1x128xf32>
      %39 = vector.shape_cast %38 : vector<1x128xf32> to vector<128xf32>
      %40 = vector.broadcast %cst : f32 to vector<128xf32>
      %41 = arith.mulf %39, %40 : vector<128xf32>
      %c2_i32_12 = arith.constant 2 : i32
      %42 = arith.addi %4, %c2_i32_12 : i32
      %43 = arith.index_cast %42 : i32 to index
      %c0_13 = arith.constant 0 : index
      %44 = vector.load %arg3[%43, %c0_13] : memref<16x128xf32, #tpu.memory_space<vmem>>, vector<1x128xf32>
      %45 = vector.shape_cast %44 : vector<1x128xf32> to vector<128xf32>
      %46 = vector.shape_cast %41 : vector<128xf32> to vector<1x128xf32>
      tpu.vector_store %arg3[%43, %c0_13], %46 {strides = array<i32>} : memref<16x128xf32, #tpu.memory_space<vmem>>, vector<1x128xf32>,
      %c3_i32 = arith.constant 3 : i32
      %47 = arith.addi %4, %c3_i32 : i32
      %48 = arith.index_cast %arg0 : i32 to index
      %49 = arith.index_cast %47 : i32 to index
      %50 = memref.load %arg1[%48, %49] : memref<1x16xi32, #tpu.memory_space<smem>>
      %51 = arith.index_cast %50 : i32 to index
      %c0_14 = arith.constant 0 : index
      %52 = vector.load %arg2[%51, %c0_14] : memref<64x128xf32, #tpu.memory_space<vmem>>, vector<1x128xf32>
      %53 = vector.shape_cast %52 : vector<1x128xf32> to vector<128xf32>
      %54 = vector.broadcast %cst : f32 to vector<128xf32>
      %55 = arith.mulf %53, %54 : vector<128xf32>
      %c3_i32_15 = arith.constant 3 : i32
      %56 = arith.addi %4, %c3_i32_15 : i32
      %57 = arith.index_cast %56 : i32 to index
      %c0_16 = arith.constant 0 : index
      %58 = vector.load %arg3[%57, %c0_16] : memref<16x128xf32, #tpu.memory_space<vmem>>, vector<1x128xf32>
      %59 = vector.shape_cast %58 : vector<1x128xf32> to vector<128xf32>
      %60 = vector.shape_cast %55 : vector<128xf32> to vector<1x128xf32>
      tpu.vector_store %arg3[%57, %c0_16], %60 {strides = array<i32>} : memref<16x128xf32, #tpu.memory_space<vmem>>, vector<1x128xf32>,
      %c4_i32 = arith.constant 4 : i32
      %61 = arith.addi %4, %c4_i32 : i32
      %62 = arith.index_cast %arg0 : i32 to index
      %63 = arith.index_cast %61 : i32 to index
      %64 = memref.load %arg1[%62, %63] : memref<1x16xi32, #tpu.memory_space<smem>>
      %65 = arith.index_cast %64 : i32 to index
      %c0_17 = arith.constant 0 : index
      %66 = vector.load %arg2[%65, %c0_17] : memref<64x128xf32, #tpu.memory_space<vmem>>, vector<1x128xf32>
      %67 = vector.shape_cast %66 : vector<1x128xf32> to vector<128xf32>
      %68 = vector.broadcast %cst : f32 to vector<128xf32>
      %69 = arith.mulf %67, %68 : vector<128xf32>
      %c4_i32_18 = arith.constant 4 : i32
      %70 = arith.addi %4, %c4_i32_18 : i32
      %71 = arith.index_cast %70 : i32 to index
      %c0_19 = arith.constant 0 : index
      %72 = vector.load %arg3[%71, %c0_19] : memref<16x128xf32, #tpu.memory_space<vmem>>, vector<1x128xf32>
      %73 = vector.shape_cast %72 : vector<1x128xf32> to vector<128xf32>
      %74 = vector.shape_cast %69 : vector<128xf32> to vector<1x128xf32>
      tpu.vector_store %arg3[%71, %c0_19], %74 {strides = array<i32>} : memref<16x128xf32, #tpu.memory_space<vmem>>, vector<1x128xf32>,
      %c5_i32 = arith.constant 5 : i32
      %75 = arith.addi %4, %c5_i32 : i32
      %76 = arith.index_cast %arg0 : i32 to index
      %77 = arith.index_cast %75 : i32 to index
      %78 = memref.load %arg1[%76, %77] : memref<1x16xi32, #tpu.memory_space<smem>>
      %79 = arith.index_cast %78 : i32 to index
      %c0_20 = arith.constant 0 : index
      %80 = vector.load %arg2[%79, %c0_20] : memref<64x128xf32, #tpu.memory_space<vmem>>, vector<1x128xf32>
      %81 = vector.shape_cast %80 : vector<1x128xf32> to vector<128xf32>
      %82 = vector.broadcast %cst : f32 to vector<128xf32>
      %83 = arith.mulf %81, %82 : vector<128xf32>
      %c5_i32_21 = arith.constant 5 : i32
      %84 = arith.addi %4, %c5_i32_21 : i32
      %85 = arith.index_cast %84 : i32 to index
      %c0_22 = arith.constant 0 : index
      %86 = vector.load %arg3[%85, %c0_22] : memref<16x128xf32, #tpu.memory_space<vmem>>, vector<1x128xf32>
      %87 = vector.shape_cast %86 : vector<1x128xf32> to vector<128xf32>
      %88 = vector.shape_cast %83 : vector<128xf32> to vector<1x128xf32>
      tpu.vector_store %arg3[%85, %c0_22], %88 {strides = array<i32>} : memref<16x128xf32, #tpu.memory_space<vmem>>, vector<1x128xf32>,
      %c6_i32 = arith.constant 6 : i32
      %89 = arith.addi %4, %c6_i32 : i32
      %90 = arith.index_cast %arg0 : i32 to index
      %91 = arith.index_cast %89 : i32 to index
      %92 = memref.load %arg1[%90, %91] : memref<1x16xi32, #tpu.memory_space<smem>>
      %93 = arith.index_cast %92 : i32 to index
      %c0_23 = arith.constant 0 : index
      %94 = vector.load %arg2[%93, %c0_23] : memref<64x128xf32, #tpu.memory_space<vmem>>, vector<1x128xf32>
      %95 = vector.shape_cast %94 : vector<1x128xf32> to vector<128xf32>
      %96 = vector.broadcast %cst : f32 to vector<128xf32>
      %97 = arith.mulf %95, %96 : vector<128xf32>
      %c6_i32_24 = arith.constant 6 : i32
      %98 = arith.addi %4, %c6_i32_24 : i32
      %99 = arith.index_cast %98 : i32 to index
      %c0_25 = arith.constant 0 : index
      %100 = vector.load %arg3[%99, %c0_25] : memref<16x128xf32, #tpu.memory_space<vmem>>, vector<1x128xf32>
      %101 = vector.shape_cast %100 : vector<1x128xf32> to vector<128xf32>
      %102 = vector.shape_cast %97 : vector<128xf32> to vector<1x128xf32>
      tpu.vector_store %arg3[%99, %c0_25], %102 {strides = array<i32>} : memref<16x128xf32, #tpu.memory_space<vmem>>, vector<1x128xf32>,
      %c7_i32 = arith.constant 7 : i32
      %103 = arith.addi %4, %c7_i32 : i32
      %104 = arith.index_cast %arg0 : i32 to index
      %105 = arith.index_cast %103 : i32 to index
      %106 = memref.load %arg1[%104, %105] : memref<1x16xi32, #tpu.memory_space<smem>>
      %107 = arith.index_cast %106 : i32 to index
      %c0_26 = arith.constant 0 : index
      %108 = vector.load %arg2[%107, %c0_26] : memref<64x128xf32, #tpu.memory_space<vmem>>, vector<1x128xf32>
      %109 = vector.shape_cast %108 : vector<1x128xf32> to vector<128xf32>
      %110 = vector.broadcast %cst : f32 to vector<128xf32>
      %111 = arith.mulf %109, %110 : vector<128xf32>
      %c7_i32_27 = arith.constant 7 : i32
      %112 = arith.addi %4, %c7_i32_27 : i32
      %113 = arith.index_cast %112 : i32 to index
      %c0_28 = arith.constant 0 : index
      %114 = vector.load %arg3[%113, %c0_28] : memref<16x128xf32, #tpu.memory_space<vmem>>, vector<1x128xf32>
      %115 = vector.shape_cast %114 : vector<1x128xf32> to vector<128xf32>
      %116 = vector.shape_cast %111 : vector<128xf32> to vector<1x128xf32>
      tpu.vector_store %arg3[%113, %c0_28], %116 {strides = array<i32>} : memref<16x128xf32, #tpu.memory_space<vmem>>, vector<1x128xf32>,
    }
    %c2_i32_0 = arith.constant 2 : i32
    return
  }
  func.func @transform_0(%arg0: i32, %arg1: memref<1x16xi32, #tpu.memory_space<smem>>) -> (i32, i32) {
    %c0_i32 = arith.constant 0 : i32
    %c0_i32_0 = arith.constant 0 : i32
    %c0_i32_1 = arith.constant 0 : i32
    return %c0_i32, %c0_i32_0 : i32, i32
  }
  func.func @transform_1(%arg0: i32, %arg1: memref<1x16xi32, #tpu.memory_space<smem>>) -> (i32, i32) {
    %c0_i32 = arith.constant 0 : i32
    %c0_i32_0 = arith.constant 0 : i32
    return %arg0, %c0_i32 : i32, i32
  }
}

</mosaic_0001>

<llo_original>
// kernel: tpu_custom_call.1
$region0: #{tpu_custom_call.1}
  #allocation0 [shape = 'u32[]', space=smem, size = 0x4, offset = 0x4, fixed_abs, tag = 'smem constant byte address 0x4 - core index']
  #allocation1 [shape = 'u32[144,128]{1,0:T(1,128)}', space=vmem, size = 0x12000, scoped, tag = 'internal scratch']
  #allocation2 [shape = 's32[1]{0}', space=sflag, size = 0x4, scoped, tag = 'scoped memory for tpu_custom_call.1']
  #allocation3 [shape = 'u8[512]{0}', space=smem, size = 0x200, scoped, tag = 'prefetched SMEM operand 0']
  %s0 = inlined_call_operand.hbm [shape: s32[1,16], index: 0, kind: input, shape index: {}]
  %s1 = inlined_call_operand.hbm [shape: f32[64,128], index: 1, kind: input, shape index: {}]
  %s2 = inlined_call_operand.hbm [shape: f32[16,128], index: 2, kind: output, shape index: {}]
  %s3 = sld [smem:[#allocation0]]
  $region25: #{tpu_custom_call.1} parent=0
    _
  %s5 = ssub.s32 1, %s3
  %s6 = scalar_select 0, %s5, %s3
  %8 = dma.hbm_to_smem %s0, 16, [#allocation3], [#allocation2]
  %9 = dma.done [#allocation2], 16
  %10 = sfence
  $region1: #{tpu_custom_call.1} parent=0
    #allocation4 [shape = 'u8[32768]{0}', space=vmem, size = 0x8000, scoped, tag = 'input window, operand 1, single buffered']
    #allocation5 [shape = 's32[1]{0}', space=sflag, size = 0x4, scoped, tag = 'scoped memory for tpu_custom_call.1']
    #allocation6 [shape = 's32[1]{0}', space=sflag, size = 0x4, scoped, tag = 'scoped memory for tpu_custom_call.1']
    #allocation7 [shape = 'u8[8192]{0}', space=vmem, size = 0x2000, scoped, tag = 'output window, operand 0, single buffered']
    %11 = vsyncpa [#allocation5], 0
    %12 = vsyncpa [#allocation6], 0
    // Predicated region
    $region2: #{tpu_custom_call.1} parent=1 // pred_check
      _
    $region3: #{tpu_custom_call.1} parent=1 // pred_check_branch
      %14 = sbr.rel (0) target = $region5
    $region4: #{tpu_custom_call.1} parent=1 // pred_region
      %s16 = ssub.s32 1024, 1024
      %17 = vsyncadd [#allocation5], %s16
      %s18 = sshll.u32 [#allocation4], 4
      %s19 = int_to_ptr.vmem [resolvable:$true] %s18
      %24 = dma.hbm_to_vmem [thread:$0]  %s1, 1024, %s19, [#allocation5], 128, 128, 8
    $region5: #{tpu_custom_call.1} parent=1 // pred_fallthru
      _
    // Predicated region
    $region6: #{tpu_custom_call.1} parent=1 // pred_check
      _
    $region7: #{tpu_custom_call.1} parent=1 // pred_check_branch
      %26 = sbr.rel (0) target = $region9
    $region8: #{tpu_custom_call.1} parent=1 // pred_region
      %27 = dma.done [#allocation5], 1024
    $region9: #{tpu_custom_call.1} parent=1 // pred_fallthru
      _
    loop: start=0, step=1, limit=2
    $region10: #{tpu_custom_call.1} parent=1 // loop_pre_header
      _
    $region11: #{tpu_custom_call.1} parent=1 // loop_header
      %s29 = sphi 0, %s33
      %p30 = scmp.ge.s32.totalorder %s29, 2
    $region12: #{tpu_custom_call.1} parent=1 // loop_header_branch
      %32 = sbr.rel (%p30) target = $region16
    $region13: #{tpu_custom_call.1} parent=1 // loop_body
      %s34 = smul.u32 %s29, 8
      %s35 = sshra.s32 %s34, 7
      %s36 = sand.u32 %s34, 127
      %s37 = sadd.s32 %s35, 0
      %s38 = smul.u32 %s37, 128
      %s39 = sshra.s32 %s34, 7
      %s40 = sand.u32 %s34, 127
      %s41 = sadd.s32 %s38, %s40
      %s42 = sld [smem:[#allocation3 + %s41]]
      %s43 = scalar_lea.vmem [#allocation4], %s42
      %v44 = vld [vmem:[%s43] sm:$0x1]
      %v45 = vmul.f32 %v44, 5.656854
      %s46 = scalar_lea.vmem [#allocation7], %s34
      %47 = vst [vmem:[%s46] sm:$0x1] %v45
      %s48 = sadd.s32 %s34, 1
      %s49 = sshra.s32 %s48, 7
      %s50 = sand.u32 %s48, 127
      %s51 = sadd.s32 %s49, 0
      %s52 = smul.u32 %s51, 128
      %s53 = sshra.s32 %s48, 7
      %s54 = sand.u32 %s48, 127
      %s55 = sadd.s32 %s52, %s54
      %s56 = sld [smem:[#allocation3 + %s55]]
      %s57 = scalar_lea.vmem [#allocation4], %s56
      %v58 = vld [vmem:[%s57] sm:$0x1]
      %v59 = vmul.f32 %v58, 5.656854
      %s60 = scalar_lea.vmem [#allocation7], %s48
      %61 = vst [vmem:[%s60] sm:$0x1] %v59
      %s62 = sadd.s32 %s34, 2
      %s63 = sshra.s32 %s62, 7
      %s64 = sand.u32 %s62, 127
      %s65 = sadd.s32 %s63, 0
      %s66 = smul.u32 %s65, 128
      %s67 = sshra.s32 %s62, 7
      %s68 = sand.u32 %s62, 127
      %s69 = sadd.s32 %s66, %s68
      %s70 = sld [smem:[#allocation3 + %s69]]
      %s71 = scalar_lea.vmem [#allocation4], %s70
      %v72 = vld [vmem:[%s71] sm:$0x1]
      %v73 = vmul.f32 %v72, 5.656854
      %s74 = scalar_lea.vmem [#allocation7], %s62
      %75 = vst [vmem:[%s74] sm:$0x1] %v73
      %s76 = sadd.s32 %s34, 3
      %s77 = sshra.s32 %s76, 7
      %s78 = sand.u32 %s76, 127
      %s79 = sadd.s32 %s77, 0
      %s80 = smul.u32 %s79, 128
      %s81 = sshra.s32 %s76, 7
      %s82 = sand.u32 %s76, 127
      %s83 = sadd.s32 %s80, %s82
      %s84 = sld [smem:[#allocation3 + %s83]]
      %s85 = scalar_lea.vmem [#allocation4], %s84
      %v86 = vld [vmem:[%s85] sm:$0x1]
      %v87 = vmul.f32 %v86, 5.656854
      %s88 = scalar_lea.vmem [#allocation7], %s76
      %89 = vst [vmem:[%s88] sm:$0x1] %v87
      %s90 = sadd.s32 %s34, 4
      %s91 = sshra.s32 %s90, 7
      %s92 = sand.u32 %s90, 127
      %s93 = sadd.s32 %s91, 0
      %s94 = smul.u32 %s93, 128
      %s95 = sshra.s32 %s90, 7
      %s96 = sand.u32 %s90, 127
      %s97 = sadd.s32 %s94, %s96
      %s98 = sld [smem:[#allocation3 + %s97]]
      %s99 = scalar_lea.vmem [#allocation4], %s98
      %v100 = vld [vmem:[%s99] sm:$0x1]
      %v101 = vmul.f32 %v100, 5.656854
      %s102 = scalar_lea.vmem [#allocation7], %s90
      %103 = vst [vmem:[%s102] sm:$0x1] %v101
      %s104 = sadd.s32 %s34, 5
      %s105 = sshra.s32 %s104, 7
      %s106 = sand.u32 %s104, 127
      %s107 = sadd.s32 %s105, 0
      %s108 = smul.u32 %s107, 128
      %s109 = sshra.s32 %s104, 7
      %s110 = sand.u32 %s104, 127
      %s111 = sadd.s32 %s108, %s110
      %s112 = sld [smem:[#allocation3 + %s111]]
      %s113 = scalar_lea.vmem [#allocation4], %s112
      %v114 = vld [vmem:[%s113] sm:$0x1]
      %v115 = vmul.f32 %v114, 5.656854
      %s116 = scalar_lea.vmem [#allocation7], %s104
      %117 = vst [vmem:[%s116] sm:$0x1] %v115
      %s118 = sadd.s32 %s34, 6
      %s119 = sshra.s32 %s118, 7
      %s120 = sand.u32 %s118, 127
      %s121 = sadd.s32 %s119, 0
      %s122 = smul.u32 %s121, 128
      %s123 = sshra.s32 %s118, 7
      %s124 = sand.u32 %s118, 127
      %s125 = sadd.s32 %s122, %s124
      %s126 = sld [smem:[#allocation3 + %s125]]
      %s127 = scalar_lea.vmem [#allocation4], %s126
      %v128 = vld [vmem:[%s127] sm:$0x1]
      %v129 = vmul.f32 %v128, 5.656854
      %s130 = scalar_lea.vmem [#allocation7], %s118
      %131 = vst [vmem:[%s130] sm:$0x1] %v129
      %s132 = sadd.s32 %s34, 7
      %s133 = sshra.s32 %s132, 7
      %s134 = sand.u32 %s132, 127
      %s135 = sadd.s32 %s133, 0
      %s136 = smul.u32 %s135, 128
      %s137 = sshra.s32 %s132, 7
      %s138 = sand.u32 %s132, 127
      %s139 = sadd.s32 %s136, %s138
      %s140 = sld [smem:[#allocation3 + %s139]]
      %s141 = scalar_lea.vmem [#allocation4], %s140
      %v142 = vld [vmem:[%s141] sm:$0x1]
      %v143 = vmul.f32 %v142, 5.656854
      %s144 = scalar_lea.vmem [#allocation7], %s132
      %145 = vst [vmem:[%s144] sm:$0x1] %v143
    $region14: #{tpu_custom_call.1} parent=1 // loop_footer
      %s33 = sadd.s32 1, %s29
    $region15: #{tpu_custom_call.1} parent=1 // loop_footer_branch
      %28 = sbr.rel target = $region11
    $region16: #{tpu_custom_call.1} parent=1 // loop_exit
      _
    // Predicated region
    $region17: #{tpu_custom_call.1} parent=1 // pred_check
      _
    $region18: #{tpu_custom_call.1} parent=1 // pred_check_branch
      %147 = sbr.rel (0) target = $region20
    $region19: #{tpu_custom_call.1} parent=1 // pred_region
      %s149 = ssub.s32 256, 256
      %150 = vsyncadd [#allocation6], %s149
      %s151 = sshll.u32 [#allocation7], 4
      %s152 = int_to_ptr.vmem [resolvable:$true] %s151
      %157 = dma.vmem_to_hbm [thread:$0]  %s152, 256, %s2, [#allocation6], 128, 128, 8
    $region20: #{tpu_custom_call.1} parent=1 // pred_fallthru
      _
    // Predicated region
    $region21: #{tpu_custom_call.1} parent=1 // pred_check
      _
    $region22: #{tpu_custom_call.1} parent=1 // pred_check_branch
      %159 = sbr.rel (0) target = $region24
    $region23: #{tpu_custom_call.1} parent=1 // pred_region
      %160 = dma.done [#allocation6], 256
    $region24: #{tpu_custom_call.1} parent=1 // pred_fallthru
      _
    %161 = vsyncpa [#allocation5], 1
    %162 = vsyncpa [#allocation6], 1

</llo_original>
